<compile_context>
chip_gen: v6e
topology: v6e:2x2x1
jax: 0.10.0
libtpu: 0.0.40
codegen_flags: <defaults>
</compile_context>

<pallas_src>
import functools

import numpy as np
import jax
import jax.numpy as jnp
from jax import lax
from jax.experimental import pallas as pl
from jax.experimental.pallas import tpu as pltpu


def _round_up(x, m):
    return ((x + m - 1) // m) * m


def _vmem_capacity_bytes():
    try:
        return int(pltpu.get_tpu_info().vmem_capacity_bytes)
    except Exception:
        return 64 * 2 ** 20          # conservative default: v7x per-core VMEM


def _vmem_estimate(n, d, tm, itemsize, emit_logits, p_cols):
    resident = 2 * n * d * itemsize      # resident RHS; assume double-buffered
    sim_tmp = 3 * tm * n * 4             # sim / masked / exp temporaries
    loss_out = 2 * tm * 4                # (tm, 1) loss block, double-buffered
    total = resident + sim_tmp + loss_out
    if emit_logits:
        total += 2 * tm * p_cols * 4     # logits block, double-buffered
        total += 5 * tm * p_cols * 4     # padded sim, rolls, selects, assembly
    return total


def _pick_block_rows(n, d, itemsize, emit_logits, budget):
    bs = n // 2
    p_cols = _round_up(n - 1, 128)
    min_tm = 16 if itemsize < 4 else 8   # bf16 packs two rows per sublane word
    cands = [t for t in (1024, 512, 256, 128, 64, 32, 16, 8)
             if min_tm <= t <= bs and bs % t == 0]
    for tm in cands:
        if _vmem_estimate(n, d, tm, itemsize, emit_logits, p_cols) <= budget:
            return tm
    if cands:                            # over budget: smallest valid tile
        return cands[-1]
    return n                             # tiny inputs: one full-array block


def _simclr_kernel(f_all_ref, *out_refs, bs, n, tm, p_cols, inv_temp,
                   emit_logits, mxu_dtype):
    """One row-block of the SimCLR loss.

    f_all_ref : (N, D) resident feature matrix (only HBM input stream).
    out_refs  : (logits_ref?, loss_ref)
                logits_ref : (TM, P)  lane-dense padded torch-layout logits
                loss_ref   : (TM, 1)  per-row (logsumexp - positive)
    """
    if emit_logits:
        logits_ref, loss_ref = out_refs
    else:
        (loss_ref,) = out_refs

    neg_inf = jnp.float32(-jnp.inf)
    f_all = f_all_ref[...]

    if tm == n:
        # Single block: partner rows are a static roll of the resident matrix.
        row0 = 0
        f_row = f_all
        f_part32 = jnp.roll(f_all.astype(jnp.float32), -bs, axis=0)
    else:
        row0 = pl.multiple_of(pl.program_id(0) * tm, tm)
        f_row = f_all_ref[pl.ds(row0, tm), :]
        # tm | bs, so the partner block never straddles the wrap point.
        part0 = pl.multiple_of(jnp.where(row0 < bs, row0 + bs, row0 - bs), tm)
        f_part32 = f_all_ref[pl.ds(part0, tm), :].astype(jnp.float32)

    # Fold 1/temperature into the row operand: scales both sim and pos once.
    f_row_s = f_row * jnp.asarray(inv_temp, dtype=f_row.dtype)

    lhs, rhs = f_row_s, f_all
    if mxu_dtype is not None:
        lhs = lhs.astype(mxu_dtype)
        rhs = rhs.astype(mxu_dtype)
    prec = lax.Precision.HIGHEST if lhs.dtype == jnp.float32 else None
    sim = lax.dot_general(lhs, rhs, (((1,), (1,)), ((), ())),
                          precision=prec,
                          preferred_element_type=jnp.float32)        # (tm, n)

    row_g = row0 + lax.broadcasted_iota(jnp.int32, (tm, 1), 0)       # (tm, 1)
    col = lax.broadcasted_iota(jnp.int32, (1, n), 1)                 # (1, n)

    # logsumexp over the off-diagonal entries of each row.
    masked = jnp.where(col == row_g, neg_inf, sim)
    m = jnp.max(masked, axis=-1, keepdims=True)
    lse = m + jnp.log(jnp.sum(jnp.exp(masked - m), axis=-1, keepdims=True))

    # Positive-pair similarity: O(TM*D) elementwise dot, already temp-scaled.
    pos = jnp.sum(f_row_s.astype(jnp.float32) * f_part32,
                  axis=-1, keepdims=True)                            # (tm, 1)

    loss_ref[...] = lse - pos

    if emit_logits:
        # Torch layout: negatives in original column order, positive last,
        # -inf in the pad lanes.  Row i drops columns {r, r + bs}, r = i % bs,
        # so output lane k < n-2 reads source column k + (k>=r) + (k>=r+bs-1).
        if p_cols > n:
            simp = jnp.concatenate(
                [sim, jnp.full((tm, p_cols - n), neg_inf, jnp.float32)], axis=1)
        else:
            simp = sim                                               # p_cols == n
        s1 = jnp.roll(simp, -1, axis=1)   # simp[:, k+1]
        s2 = jnp.roll(simp, -2, axis=1)   # simp[:, k+2]
        k = lax.broadcasted_iota(jnp.int32, (1, p_cols), 1)          # (1, p)
        r = row_g - jnp.where(row_g >= bs, bs, 0)                    # (tm, 1)
        negs = jnp.where(k < r, simp, jnp.where(k < r + (bs - 1), s1, s2))
        out = jnp.where(k == (n - 2), pos,
                        jnp.where(k < (n - 2), negs, neg_inf))
        logits_ref[...] = out.astype(logits_ref.dtype)   # one dense (tm, P) store


def simclr_loss(features, temperature, *, return_logits=True, block_rows=None,
                logits_dtype=jnp.float32, mxu_dtype=None):
    """Pallas SimCLR loss.

    return_logits=True  -> (loss, logits, labels)   (matches the torch forward)
    return_logits=False -> loss only (training fast path; no N x (N-1) logits
                           are materialized in HBM).
    logits_dtype / mxu_dtype: optional bf16 knobs (mainly useful on v5e).
    """
    n, d = features.shape
    assert n % 2 == 0 and n >= 4, "features must stack two views: shape (2*bs, D)"
    bs = n // 2
    itemsize = np.dtype(features.dtype).itemsize
    p_cols = _round_up(n - 1, 128)

    vmem_cap = _vmem_capacity_bytes()
    budget = int(0.75 * vmem_cap)
    tm = (block_rows if block_rows is not None
          else _pick_block_rows(n, d, itemsize, return_logits, budget))
    assert n % tm == 0, "row tile must divide N"
    assert tm == n or (tm <= bs and bs % tm == 0), \
        "row tile must divide the per-view batch size (or cover the whole input)"

    kernel = functools.partial(
        _simclr_kernel, bs=bs, n=n, tm=tm, p_cols=p_cols,
        inv_temp=1.0 / float(temperature), emit_logits=return_logits,
        mxu_dtype=mxu_dtype)

    loss_sd = jax.ShapeDtypeStruct((n, 1), jnp.float32)
    loss_spec = pl.BlockSpec((tm, 1), lambda i: (i, 0))
    if return_logits:
        out_shape = (jax.ShapeDtypeStruct((n, p_cols), logits_dtype), loss_sd)
        out_specs = (pl.BlockSpec((tm, p_cols), lambda i: (i, 0)), loss_spec)
    else:
        out_shape = (loss_sd,)
        out_specs = (loss_spec,)

    est = _vmem_estimate(n, d, tm, itemsize, return_logits, p_cols)
    vmem_limit = int(min(max(2 * est, 32 * 2 ** 20), int(0.85 * vmem_cap)))

    outs = pl.pallas_call(
        kernel,
        out_shape=out_shape,
        grid_spec=pltpu.PrefetchScalarGridSpec(
            num_scalar_prefetch=0,
            grid=(n // tm,),
            in_specs=[pl.BlockSpec((n, d), lambda i: (0, 0))],  # resident features
            out_specs=out_specs),
        compiler_params=pltpu.CompilerParams(
            dimension_semantics=("parallel",),
            vmem_limit_bytes=vmem_limit),
    )(features)

    if return_logits:
        logits_padded, loss_rows = outs
        loss = jnp.mean(loss_rows)
        logits = logits_padded[:, : n - 1]          # exact torch shape (N, N-1)
        labels = jnp.full((n,), n - 2, dtype=jnp.int32)
        return loss, logits, labels
    return jnp.mean(outs[0])


def _reference(features, temperature):
    """Pure-NumPy reference mirroring the torch module."""
    f = np.asarray(features, dtype=np.float32)
    n = f.shape[0]
    bs = n // 2
    lab = np.concatenate([np.arange(bs), np.arange(bs)])
    lab_mat = (lab[None, :] == lab[:, None]).astype(np.float32)
    sim = f @ f.T
    off = ~np.eye(n, dtype=bool)
    lab_mat = lab_mat[off].reshape(n, n - 1)
    sim = sim[off].reshape(n, n - 1)
    pos = sim[lab_mat.astype(bool)].reshape(n, 1)
    neg = sim[~lab_mat.astype(bool)].reshape(n, n - 2)
    logits = np.concatenate([neg, pos], axis=1) / temperature
    m = logits.max(axis=1, keepdims=True)
    lse = m + np.log(np.exp(logits - m).sum(axis=1, keepdims=True))
    loss = float(np.mean(lse[:, 0] - logits[:, -1]))
    labels = np.full((n,), n - 2, dtype=np.int32)
    return loss, logits, labels


if __name__ == "__main__":
    temperature = 0.5
    key = jax.random.PRNGKey(0)

    # Small shape implied by the module: features = (2*bs, D) = (8, 32).
    bs, feat_dim = 4, 32
    features = jax.random.normal(key, (2 * bs, feat_dim), dtype=jnp.float32)

    loss, logits, labels = simclr_loss(features, temperature)
    jax.block_until_ready((loss, logits, labels))

    ref_loss, ref_logits, ref_labels = _reference(features, temperature)
    assert logits.shape == ref_logits.shape
    assert np.allclose(np.asarray(loss), ref_loss, rtol=5e-3, atol=5e-3)
    assert np.allclose(np.asarray(logits), ref_logits, rtol=5e-3, atol=5e-3)
    assert np.array_equal(np.asarray(labels), ref_labels)

    # Multi-block path (TM < N): exercises the in-kernel row / partner slicing.
    feats2 = jax.random.normal(jax.random.PRNGKey(1), (256, 64), dtype=jnp.float32)
    loss2, logits2, labels2 = simclr_loss(feats2, temperature)
    jax.block_until_ready((loss2, logits2, labels2))
    ref2_loss, ref2_logits, _ = _reference(feats2, temperature)
    assert np.allclose(np.asarray(loss2), ref2_loss, rtol=5e-3, atol=5e-3)
    assert np.allclose(np.asarray(logits2), ref2_logits, rtol=5e-3, atol=5e-3)

    # Loss-only fast path with bf16 features (no logits materialized in HBM).
    loss_bf16 = simclr_loss(features.astype(jnp.bfloat16), temperature,
                            return_logits=False)
    jax.block_until_ready(loss_bf16)
    assert np.allclose(np.asarray(loss_bf16), ref_loss, rtol=1e-1, atol=1e-1)

    print("KERNEL_OK")
</pallas_src>

<mosaic_0001>
module attributes {stable_mosaic.version = 11 : i64} {
  func.func @_simclr_kernel(%arg0: i32, %arg1: memref<8x32xf32, #tpu.memory_space<vmem>>, %arg2: memref<8x128xf32, #tpu.memory_space<vmem>>, %arg3: memref<8x1xf32, #tpu.memory_space<vmem>>) attributes {dimension_semantics = [#tpu.dimension_semantics<parallel>], iteration_bounds = array<i64: 1>, scalar_prefetch = 0 : i64, scratch_operands = 0 : i64, tpu.core_type = #tpu.core_type<tc>, window_params = [{pipeline_mode = #tpu.pipeline_mode<synchronous>, transform_indices = @transform_0, window_bounds = array<i64: 8, 32>}, {transform_indices = @transform_1, window_bounds = array<i64: 8, 128>}, {transform_indices = @transform_2, window_bounds = array<i64: 8, 1>}]} {
    %c0 = arith.constant 0 : index
    %c0_0 = arith.constant 0 : index
    %0 = vector.load %arg1[%c0, %c0_0] : memref<8x32xf32, #tpu.memory_space<vmem>>, vector<8x32xf32>
    %1 = vector.extract_strided_slice %0 {offsets = [4, 0], sizes = [4, 32], strides = [1, 1]} : vector<8x32xf32> to vector<4x32xf32>
    %2 = vector.extract_strided_slice %0 {offsets = [0, 0], sizes = [4, 32], strides = [1, 1]} : vector<8x32xf32> to vector<4x32xf32>
    %3 = tpu.concatenate %1, %2 in 0 : vector<4x32xf32>, vector<4x32xf32> -> vector<8x32xf32>
    %cst = arith.constant 2.000000e+00 : f32
    %4 = vector.broadcast %cst : f32 to vector<8x32xf32>
    %5 = arith.mulf %0, %4 : vector<8x32xf32>
    %cst_1 = arith.constant dense<0.000000e+00> : vector<8x8xf32>
    %6 = tpu.matmul %5, %0, %cst_1 {dimension_numbers = #tpu.dot_dimension_numbers<[1], [1], [0], [0], [0, 0, 1, 0], [], []>, precision = #tpu.contract_precision<fp32>} : vector<8x32xf32>, vector<8x32xf32>, vector<8x8xf32> -> vector<8x8xf32>
    %7 = tpu.iota {dimensions = array<i32: 0>} : vector<8x1xi32>
    %c0_i32 = arith.constant 0 : i32
    %8 = vector.broadcast %c0_i32 : i32 to vector<8x1xi32>
    %9 = arith.addi %8, %7 : vector<8x1xi32>
    %10 = tpu.iota {dimensions = array<i32: 1>} : vector<1x8xi32>
    %11 = vector.broadcast %10 : vector<1x8xi32> to vector<8x8xi32>
    %12 = vector.broadcast %9 : vector<8x1xi32> to vector<8x8xi32>
    %13 = arith.cmpi eq, %11, %12 : vector<8x8xi32>
    %cst_2 = arith.constant 0xFF800000 : f32
    %14 = vector.broadcast %cst_2 : f32 to vector<8x8xf32>
    %15 = arith.select %13, %14, %6 : vector<8x8xi1>, vector<8x8xf32>
    %cst_3 = arith.constant dense<0xFF800000> : vector<8xf32>
    %16 = vector.multi_reduction <maximumf>, %15, %cst_3 [1] : vector<8x8xf32> to vector<8xf32>
    %17 = vector.shape_cast %16 : vector<8xf32> to vector<8x1xf32>
    %18 = vector.broadcast %17 : vector<8x1xf32> to vector<8x8xf32>
    %19 = arith.subf %15, %18 : vector<8x8xf32>
    %20 = math.exp %19 : vector<8x8xf32>
    %cst_4 = arith.constant dense<0.000000e+00> : vector<8xf32>
    %21 = vector.multi_reduction <add>, %20, %cst_4 [1] : vector<8x8xf32> to vector<8xf32>
    %22 = vector.shape_cast %21 : vector<8xf32> to vector<8x1xf32>
    %23 = math.log %22 : vector<8x1xf32>
    %24 = arith.addf %17, %23 : vector<8x1xf32>
    %25 = arith.mulf %5, %3 : vector<8x32xf32>
    %cst_5 = arith.constant dense<0.000000e+00> : vector<8xf32>
    %26 = vector.multi_reduction <add>, %25, %cst_5 [1] : vector<8x32xf32> to vector<8xf32>
    %27 = vector.shape_cast %26 : vector<8xf32> to vector<8x1xf32>
    %28 = arith.subf %24, %27 : vector<8x1xf32>
    %c0_6 = arith.constant 0 : index
    %c0_7 = arith.constant 0 : index
    %29 = vector.load %arg3[%c0_6, %c0_7] : memref<8x1xf32, #tpu.memory_space<vmem>>, vector<8x1xf32>
    tpu.vector_store %arg3[%c0_6, %c0_7], %28 {strides = array<i32>} : memref<8x1xf32, #tpu.memory_space<vmem>>, vector<8x1xf32>,
    %cst_8 = arith.constant 0xFF800000 : f32
    %30 = vector.broadcast %cst_8 : f32 to vector<8x120xf32>
    %31 = tpu.concatenate %6, %30 in 1 : vector<8x8xf32>, vector<8x120xf32> -> vector<8x128xf32>
    %32 = vector.extract_strided_slice %31 {offsets = [0, 1], sizes = [8, 127], strides = [1, 1]} : vector<8x128xf32> to vector<8x127xf32>
    %33 = vector.extract_strided_slice %31 {offsets = [0, 0], sizes = [8, 1], strides = [1, 1]} : vector<8x128xf32> to vector<8x1xf32>
    %34 = tpu.concatenate %32, %33 in 1 : vector<8x127xf32>, vector<8x1xf32> -> vector<8x128xf32>
    %35 = vector.extract_strided_slice %31 {offsets = [0, 2], sizes = [8, 126], strides = [1, 1]} : vector<8x128xf32> to vector<8x126xf32>
    %36 = vector.extract_strided_slice %31 {offsets = [0, 0], sizes = [8, 2], strides = [1, 1]} : vector<8x128xf32> to vector<8x2xf32>
    %37 = tpu.concatenate %35, %36 in 1 : vector<8x126xf32>, vector<8x2xf32> -> vector<8x128xf32>
    %38 = tpu.iota {dimensions = array<i32: 1>} : vector<1x128xi32>
    %c4_i32 = arith.constant 4 : i32
    %39 = vector.broadcast %c4_i32 : i32 to vector<8x1xi32>
    %40 = arith.cmpi sge, %9, %39 : vector<8x1xi32>
    %c4_i32_9 = arith.constant 4 : i32
    %c0_i32_10 = arith.constant 0 : i32
    %41 = vector.broadcast %c4_i32_9 : i32 to vector<8x1xi32>
    %42 = vector.broadcast %c0_i32_10 : i32 to vector<8x1xi32>
    %43 = arith.select %40, %41, %42 : vector<8x1xi1>, vector<8x1xi32>
    %44 = arith.subi %9, %43 : vector<8x1xi32>
    %45 = vector.broadcast %38 : vector<1x128xi32> to vector<8x128xi32>
    %46 = vector.broadcast %44 : vector<8x1xi32> to vector<8x128xi32>
    %47 = arith.cmpi slt, %45, %46 : vector<8x128xi32>
    %c3_i32 = arith.constant 3 : i32
    %48 = vector.broadcast %c3_i32 : i32 to vector<8x1xi32>
    %49 = arith.addi %44, %48 : vector<8x1xi32>
    %50 = vector.broadcast %38 : vector<1x128xi32> to vector<8x128xi32>
    %51 = vector.broadcast %49 : vector<8x1xi32> to vector<8x128xi32>
    %52 = arith.cmpi slt, %50, %51 : vector<8x128xi32>
    %53 = arith.select %52, %34, %37 : vector<8x128xi1>, vector<8x128xf32>
    %54 = arith.select %47, %31, %53 : vector<8x128xi1>, vector<8x128xf32>
    %c6_i32 = arith.constant 6 : i32
    %55 = vector.broadcast %c6_i32 : i32 to vector<1x128xi32>
    %56 = arith.cmpi eq, %38, %55 : vector<1x128xi32>
    %c6_i32_11 = arith.constant 6 : i32
    %57 = vector.broadcast %c6_i32_11 : i32 to vector<1x128xi32>
    %58 = arith.cmpi slt, %38, %57 : vector<1x128xi32>
    %cst_12 = arith.constant 0xFF800000 : f32
    %59 = vector.shape_cast %58 : vector<1x128xi1> to vector<1x128xi1>
    %60 = vector.broadcast %59 : vector<1x128xi1> to vector<8x128xi1>
    %61 = vector.broadcast %cst_12 : f32 to vector<8x128xf32>
    %62 = arith.select %60, %54, %61 : vector<8x128xi1>, vector<8x128xf32>
    %63 = vector.shape_cast %56 : vector<1x128xi1> to vector<1x128xi1>
    %64 = vector.broadcast %63 : vector<1x128xi1> to vector<8x128xi1>
    %65 = vector.shape_cast %27 : vector<8x1xf32> to vector<8x1xf32>
    %66 = vector.broadcast %65 : vector<8x1xf32> to vector<8x128xf32>
    %67 = arith.select %64, %66, %62 : vector<8x128xi1>, vector<8x128xf32>
    %c0_13 = arith.constant 0 : index
    %c0_14 = arith.constant 0 : index
    %68 = vector.load %arg2[%c0_13, %c0_14] : memref<8x128xf32, #tpu.memory_space<vmem>>, vector<8x128xf32>
    tpu.vector_store %arg2[%c0_13, %c0_14], %67 {strides = array<i32>} : memref<8x128xf32, #tpu.memory_space<vmem>>, vector<8x128xf32>,
    return
  }
  func.func @transform_0(%arg0: i32) -> (i32, i32) {
    %c0_i32 = arith.constant 0 : i32
    %c0_i32_0 = arith.constant 0 : i32
    %c0_i32_1 = arith.constant 0 : i32
    return %c0_i32, %c0_i32_0 : i32, i32
  }
  func.func @transform_1(%arg0: i32) -> (i32, i32) {
    %c0_i32 = arith.constant 0 : i32
    %c0_i32_0 = arith.constant 0 : i32
    return %arg0, %c0_i32 : i32, i32
  }
  func.func @transform_2(%arg0: i32) -> (i32, i32) {
    %c0_i32 = arith.constant 0 : i32
    %c0_i32_0 = arith.constant 0 : i32
    return %arg0, %c0_i32 : i32, i32
  }
}

</mosaic_0001>

<llo_original>
// kernel: tpu_custom_call.1
$region0: #{tpu_custom_call.1}
  #allocation0 [shape = 'u32[]', space=smem, size = 0x4, offset = 0x4, fixed_abs, tag = 'smem constant byte address 0x4 - core index']
  #allocation1 [shape = 'u32[144,128]{1,0:T(1,128)}', space=vmem, size = 0x12000, scoped, tag = 'internal scratch']
  %s0 = inlined_call_operand.hbm [shape: f32[8,32], index: 0, kind: input, shape index: {}]
  %s1 = inlined_call_operand.hbm [shape: f32[8,128], index: 1, kind: output, shape index: {0}]
  %s2 = inlined_call_operand.vmem [shape: f32[8,1], index: 2, kind: output, shape index: {1}]
  %3 = xla_tuple %s1, %s2
  %s4 = sld [smem:[#allocation0]]
  $region26: #{tpu_custom_call.1} parent=0
    _
  %s6 = ssub.s32 1, %s4
  %s7 = scalar_select 0, %s6, %s4
  $region1: #{tpu_custom_call.1} parent=0
    #allocation2 [shape = 'u8[4096]{0}', space=vmem, size = 0x1000, scoped, tag = 'input window, operand 0, single buffered']
    #allocation3 [shape = 's32[1]{0}', space=sflag, size = 0x4, scoped, tag = 'scoped memory for tpu_custom_call.1']
    #allocation4 [shape = 's32[1]{0}', space=sflag, size = 0x4, scoped, tag = 'scoped memory for tpu_custom_call.1']
    #allocation5 [shape = 'u8[4096]{0}', space=vmem, size = 0x1000, scoped, tag = 'output window, operand 0, single buffered']
    %8 = vsyncpa [#allocation3], 0
    %9 = vsyncpa [#allocation4], 0
    // Predicated region
    $region2: #{tpu_custom_call.1} parent=1 // pred_check
      _
    $region3: #{tpu_custom_call.1} parent=1 // pred_check_branch
      %11 = sbr.rel (0) target = $region5
    $region4: #{tpu_custom_call.1} parent=1 // pred_region
      %s13 = ssub.s32 128, 128
      %14 = vsyncadd [#allocation3], %s13
      %s16 = sshll.u32 [#allocation2], 4
      %s17 = int_to_ptr.vmem [resolvable:$true] %s16
      %19 = dma.hbm_to_vmem [thread:$0]  %s0, 128, %s17, [#allocation3]
    $region5: #{tpu_custom_call.1} parent=1 // pred_fallthru
      _
    // Predicated region
    $region6: #{tpu_custom_call.1} parent=1 // pred_check
      _
    $region7: #{tpu_custom_call.1} parent=1 // pred_check_branch
      %21 = sbr.rel (0) target = $region9
    $region8: #{tpu_custom_call.1} parent=1 // pred_region
      %22 = dma.done [#allocation3], 128
    $region9: #{tpu_custom_call.1} parent=1 // pred_fallthru
      _
    %v23 = vld [vmem:[#allocation2] sm:$0xff]
    %v25 = vrot.slane %v23, 4
    %vm27 = vcmask 1043456
    %v28 = vsel %vm27, %v25, %v25
    %v29 = vmul.f32 %v23, 2.0
    %vm30 = vcmask 261120
    %v32 = vsel %vm30, %v29, 0
    %v34 = vsel %vm30, %v23, 0
    %36 = vmatprep.subr.mxu0 0.0
    %37 = vmatpush1.xpose.msra.mxu0 0.0
    %38 = vmatprep.subr.mxu0 0.0
    %39 = vmatpush1.xpose.msra.mxu0 0.0
    %40 = vmatprep.subr.mxu0 0.0
    %41 = vmatpush1.xpose.msra.mxu0 0.0
    %42 = vmatprep.subr.mxu0 0.0
    %43 = vmatpush1.xpose.msra.mxu0 0.0
    %44 = vmatprep.subr.mxu0 0.0
    %45 = vmatpush1.xpose.msra.mxu0 0.0
    %46 = vmatprep.subr.mxu0 0.0
    %47 = vmatpush1.xpose.msra.mxu0 0.0
    %48 = vmatprep.subr.mxu0 0.0
    %49 = vmatpush1.xpose.msra.mxu0 0.0
    %50 = vmatprep.subr.mxu0 0.0
    %51 = vmatpush1.xpose.msra.mxu0 0.0
    %52 = vmatprep.subr.mxu0 0.0
    %53 = vmatpush1.xpose.msra.mxu0 0.0
    %54 = vmatprep.subr.mxu0 0.0
    %55 = vmatpush1.xpose.msra.mxu0 0.0
    %56 = vmatprep.subr.mxu0 0.0
    %57 = vmatpush1.xpose.msra.mxu0 0.0
    %58 = vmatprep.subr.mxu0 0.0
    %59 = vmatpush1.xpose.msra.mxu0 0.0
    %60 = vmatprep.subr.mxu0 0.0
    %61 = vmatpush1.xpose.msra.mxu0 0.0
    %62 = vmatprep.subr.mxu0 0.0
    %63 = vmatpush1.xpose.msra.mxu0 0.0
    %64 = vmatprep.subr.mxu0 0.0
    %65 = vmatpush1.xpose.msra.mxu0 0.0
    %66 = vmatprep.subr.mxu0 0.0
    %v67 = vand.u32 %v34, 4294901760
    %68 = vmatpush1.xpose.msra.mxu0 %v67
    %69 = vmatprep.subr.mxu0 0.0
    %70 = vmatpush2.xpose.msra.mxu0 0.0
    %71 = vmatprep.subr.mxu0 0.0
    %72 = vmatpush2.xpose.msra.mxu0 0.0
    %73 = vmatprep.subr.mxu0 0.0
    %74 = vmatpush2.xpose.msra.mxu0 0.0
    %75 = vmatprep.subr.mxu0 0.0
    %76 = vmatpush2.xpose.msra.mxu0 0.0
    %77 = vmatprep.subr.mxu0 0.0
    %78 = vmatpush2.xpose.msra.mxu0 0.0
    %79 = vmatprep.subr.mxu0 0.0
    %80 = vmatpush2.xpose.msra.mxu0 0.0
    %81 = vmatprep.subr.mxu0 0.0
    %82 = vmatpush2.xpose.msra.mxu0 0.0
    %83 = vmatprep.subr.mxu0 0.0
    %84 = vmatpush2.xpose.msra.mxu0 0.0
    %85 = vmatprep.subr.mxu0 0.0
    %86 = vmatpush2.xpose.msra.mxu0 0.0
    %87 = vmatprep.subr.mxu0 0.0
    %88 = vmatpush2.xpose.msra.mxu0 0.0
    %89 = vmatprep.subr.mxu0 0.0
    %90 = vmatpush2.xpose.msra.mxu0 0.0
    %91 = vmatprep.subr.mxu0 0.0
    %92 = vmatpush2.xpose.msra.mxu0 0.0
    %93 = vmatprep.subr.mxu0 0.0
    %94 = vmatpush2.xpose.msra.mxu0 0.0
    %95 = vmatprep.subr.mxu0 0.0
    %96 = vmatpush2.xpose.msra.mxu0 0.0
    %97 = vmatprep.subr.mxu0 0.0
    %98 = vmatpush2.xpose.msra.mxu0 0.0
    %99 = vmatprep.subr.mxu0 0.0
    %100 = vmatpush2.xpose.msra.mxu0 0.0
    %101 = vmatprep.mubr.f32.mxu0 0.0
    %v102 = vand.u32 %v32, 4294901760
    %v103 = vsub.f32 %v32, %v102
    %v104 = vand.u32 %v103, 4294901760
    %v105 = vsub.f32 %v103, %v104
    %v106 = vand.u32 %v105, 4294901760
    %107 = vmatmul.mubr.f32.gmra.mxu0 %v106
    %v108 = vpop.f32.mrf.mxu0
    %v109 = vadd.f32 0.0, %v108
    %v110 = vpop.f32.mrf.mxu0
    %111 = vdwg.mxu0
    %112 = vmatprep.subr.mxu0 0.0
    %113 = vmatpush1.xpose.msra.mxu0 0.0
    %114 = vmatprep.subr.mxu0 0.0
    %115 = vmatpush1.xpose.msra.mxu0 0.0
    %116 = vmatprep.subr.mxu0 0.0
    %117 = vmatpush1.xpose.msra.mxu0 0.0
    %118 = vmatprep.subr.mxu0 0.0
    %119 = vmatpush1.xpose.msra.mxu0 0.0
    %120 = vmatprep.subr.mxu0 0.0
    %121 = vmatpush1.xpose.msra.mxu0 0.0
    %122 = vmatprep.subr.mxu0 0.0
    %123 = vmatpush1.xpose.msra.mxu0 0.0
    %124 = vmatprep.subr.mxu0 0.0
    %125 = vmatpush1.xpose.msra.mxu0 0.0
    %126 = vmatprep.subr.mxu0 0.0
    %127 = vmatpush1.xpose.msra.mxu0 0.0
    %128 = vmatprep.subr.mxu0 0.0
    %129 = vmatpush1.xpose.msra.mxu0 0.0
    %130 = vmatprep.subr.mxu0 0.0
    %131 = vmatpush1.xpose.msra.mxu0 0.0
    %132 = vmatprep.subr.mxu0 0.0
    %133 = vmatpush1.xpose.msra.mxu0 0.0
    %134 = vmatprep.subr.mxu0 0.0
    %135 = vmatpush1.xpose.msra.mxu0 0.0
    %136 = vmatprep.subr.mxu0 0.0
    %137 = vmatpush1.xpose.msra.mxu0 0.0
    %138 = vmatprep.subr.mxu0 0.0
    %139 = vmatpush1.xpose.msra.mxu0 0.0
    %140 = vmatprep.subr.mxu0 0.0
    %141 = vmatpush1.xpose.msra.mxu0 0.0
    %142 = vmatprep.subr.mxu0 0.0
    %v143 = vand.u32 %v34, 4294901760
    %v144 = vsub.f32 %v34, %v143
    %v145 = vand.u32 %v144, 4294901760
    %v146 = vsub.f32 %v144, %v145
    %v147 = vand.u32 %v146, 4294901760
    %148 = vmatpush1.xpose.msra.mxu0 %v147
    %149 = vmatprep.subr.mxu0 0.0
    %150 = vmatpush2.xpose.msra.mxu0 0.0
    %151 = vmatprep.subr.mxu0 0.0
    %152 = vmatpush2.xpose.msra.mxu0 0.0
    %153 = vmatprep.subr.mxu0 0.0
    %154 = vmatpush2.xpose.msra.mxu0 0.0
    %155 = vmatprep.subr.mxu0 0.0
    %156 = vmatpush2.xpose.msra.mxu0 0.0
    %157 = vmatprep.subr.mxu0 0.0
    %158 = vmatpush2.xpose.msra.mxu0 0.0
    %159 = vmatprep.subr.mxu0 0.0
    %160 = vmatpush2.xpose.msra.mxu0 0.0
    %161 = vmatprep.subr.mxu0 0.0
    %162 = vmatpush2.xpose.msra.mxu0 0.0
    %163 = vmatprep.subr.mxu0 0.0
    %164 = vmatpush2.xpose.msra.mxu0 0.0
    %165 = vmatprep.subr.mxu0 0.0
    %166 = vmatpush2.xpose.msra.mxu0 0.0
    %167 = vmatprep.subr.mxu0 0.0
    %168 = vmatpush2.xpose.msra.mxu0 0.0
    %169 = vmatprep.subr.mxu0 0.0
    %170 = vmatpush2.xpose.msra.mxu0 0.0
    %171 = vmatprep.subr.mxu0 0.0
    %172 = vmatpush2.xpose.msra.mxu0 0.0
    %173 = vmatprep.subr.mxu0 0.0
    %174 = vmatpush2.xpose.msra.mxu0 0.0
    %175 = vmatprep.subr.mxu0 0.0
    %176 = vmatpush2.xpose.msra.mxu0 0.0
    %177 = vmatprep.subr.mxu0 0.0
    %178 = vmatpush2.xpose.msra.mxu0 0.0
    %179 = vmatprep.subr.mxu0 0.0
    %180 = vmatpush2.xpose.msra.mxu0 0.0
    %181 = vmatprep.mubr.f32.mxu0 0.0
    %v182 = vand.u32 %v32, 4294901760
    %183 = vmatmul.mubr.f32.gmra.mxu0 %v182
    %v184 = vpop.f32.mrf.mxu0
    %v185 = vadd.f32 %v109, %v184
    %v186 = vpop.f32.mrf.mxu0
    %187 = vdwg.mxu0
    %188 = vmatprep.subr.mxu0 0.0
    %189 = vmatpush1.xpose.msra.mxu0 0.0
    %190 = vmatprep.subr.mxu0 0.0
    %191 = vmatpush1.xpose.msra.mxu0 0.0
    %192 = vmatprep.subr.mxu0 0.0
    %193 = vmatpush1.xpose.msra.mxu0 0.0
    %194 = vmatprep.subr.mxu0 0.0
    %195 = vmatpush1.xpose.msra.mxu0 0.0
    %196 = vmatprep.subr.mxu0 0.0
    %197 = vmatpush1.xpose.msra.mxu0 0.0
    %198 = vmatprep.subr.mxu0 0.0
    %199 = vmatpush1.xpose.msra.mxu0 0.0
    %200 = vmatprep.subr.mxu0 0.0
    %201 = vmatpush1.xpose.msra.mxu0 0.0
    %202 = vmatprep.subr.mxu0 0.0
    %203 = vmatpush1.xpose.msra.mxu0 0.0
    %204 = vmatprep.subr.mxu0 0.0
    %205 = vmatpush1.xpose.msra.mxu0 0.0
    %206 = vmatprep.subr.mxu0 0.0
    %207 = vmatpush1.xpose.msra.mxu0 0.0
    %208 = vmatprep.subr.mxu0 0.0
    %209 = vmatpush1.xpose.msra.mxu0 0.0
    %210 = vmatprep.subr.mxu0 0.0
    %211 = vmatpush1.xpose.msra.mxu0 0.0
    %212 = vmatprep.subr.mxu0 0.0
    %213 = vmatpush1.xpose.msra.mxu0 0.0
    %214 = vmatprep.subr.mxu0 0.0
    %215 = vmatpush1.xpose.msra.mxu0 0.0
    %216 = vmatprep.subr.mxu0 0.0
    %217 = vmatpush1.xpose.msra.mxu0 0.0
    %218 = vmatprep.subr.mxu0 0.0
    %v219 = vand.u32 %v34, 4294901760
    %v220 = vsub.f32 %v34, %v219
    %221 = vmatpush1.xpose.msra.mxu0 %v220
    %222 = vmatprep.subr.mxu0 0.0
    %223 = vmatpush2.xpose.msra.mxu0 0.0
    %224 = vmatprep.subr.mxu0 0.0
    %225 = vmatpush2.xpose.msra.mxu0 0.0
    %226 = vmatprep.subr.mxu0 0.0
    %227 = vmatpush2.xpose.msra.mxu0 0.0
    %228 = vmatprep.subr.mxu0 0.0
    %229 = vmatpush2.xpose.msra.mxu0 0.0
    %230 = vmatprep.subr.mxu0 0.0
    %231 = vmatpush2.xpose.msra.mxu0 0.0
    %232 = vmatprep.subr.mxu0 0.0
    %233 = vmatpush2.xpose.msra.mxu0 0.0
    %234 = vmatprep.subr.mxu0 0.0
    %235 = vmatpush2.xpose.msra.mxu0 0.0
    %236 = vmatprep.subr.mxu0 0.0
    %237 = vmatpush2.xpose.msra.mxu0 0.0
    %238 = vmatprep.subr.mxu0 0.0
    %239 = vmatpush2.xpose.msra.mxu0 0.0
    %240 = vmatprep.subr.mxu0 0.0
    %241 = vmatpush2.xpose.msra.mxu0 0.0
    %242 = vmatprep.subr.mxu0 0.0
    %243 = vmatpush2.xpose.msra.mxu0 0.0
    %244 = vmatprep.subr.mxu0 0.0
    %245 = vmatpush2.xpose.msra.mxu0 0.0
    %246 = vmatprep.subr.mxu0 0.0
    %247 = vmatpush2.xpose.msra.mxu0 0.0
    %248 = vmatprep.subr.mxu0 0.0
    %249 = vmatpush2.xpose.msra.mxu0 0.0
    %250 = vmatprep.subr.mxu0 0.0
    %251 = vmatpush2.xpose.msra.mxu0 0.0
    %252 = vmatprep.subr.mxu0 0.0
    %253 = vmatpush2.xpose.msra.mxu0 0.0
    %254 = vmatprep.mubr.f32.mxu0 0.0
    %v255 = vand.u32 %v32, 4294901760
    %v256 = vsub.f32 %v32, %v255
    %257 = vmatmul.mubr.f32.gmra.mxu0 %v256
    %v258 = vpop.f32.mrf.mxu0
    %v259 = vadd.f32 %v185, %v258
    %v260 = vpop.f32.mrf.mxu0
    %261 = vdwg.mxu0
    %262 = vmatprep.subr.mxu0 0.0
    %263 = vmatpush1.xpose.msra.mxu0 0.0
    %264 = vmatprep.subr.mxu0 0.0
    %265 = vmatpush1.xpose.msra.mxu0 0.0
    %266 = vmatprep.subr.mxu0 0.0
    %267 = vmatpush1.xpose.msra.mxu0 0.0
    %268 = vmatprep.subr.mxu0 0.0
    %269 = vmatpush1.xpose.msra.mxu0 0.0
    %270 = vmatprep.subr.mxu0 0.0
    %271 = vmatpush1.xpose.msra.mxu0 0.0
    %272 = vmatprep.subr.mxu0 0.0
    %273 = vmatpush1.xpose.msra.mxu0 0.0
    %274 = vmatprep.subr.mxu0 0.0
    %275 = vmatpush1.xpose.msra.mxu0 0.0
    %276 = vmatprep.subr.mxu0 0.0
    %277 = vmatpush1.xpose.msra.mxu0 0.0
    %278 = vmatprep.subr.mxu0 0.0
    %279 = vmatpush1.xpose.msra.mxu0 0.0
    %280 = vmatprep.subr.mxu0 0.0
    %281 = vmatpush1.xpose.msra.mxu0 0.0
    %282 = vmatprep.subr.mxu0 0.0
    %283 = vmatpush1.xpose.msra.mxu0 0.0
    %284 = vmatprep.subr.mxu0 0.0
    %285 = vmatpush1.xpose.msra.mxu0 0.0
    %286 = vmatprep.subr.mxu0 0.0
    %287 = vmatpush1.xpose.msra.mxu0 0.0
    %288 = vmatprep.subr.mxu0 0.0
    %289 = vmatpush1.xpose.msra.mxu0 0.0
    %290 = vmatprep.subr.mxu0 0.0
    %291 = vmatpush1.xpose.msra.mxu0 0.0
    %292 = vmatprep.subr.mxu0 0.0
    %v293 = vand.u32 %v34, 4294901760
    %294 = vmatpush1.xpose.msra.mxu0 %v293
    %295 = vmatprep.subr.mxu0 0.0
    %296 = vmatpush2.xpose.msra.mxu0 0.0
    %297 = vmatprep.subr.mxu0 0.0
    %298 = vmatpush2.xpose.msra.mxu0 0.0
    %299 = vmatprep.subr.mxu0 0.0
    %300 = vmatpush2.xpose.msra.mxu0 0.0
    %301 = vmatprep.subr.mxu0 0.0
    %302 = vmatpush2.xpose.msra.mxu0 0.0
    %303 = vmatprep.subr.mxu0 0.0
    %304 = vmatpush2.xpose.msra.mxu0 0.0
    %305 = vmatprep.subr.mxu0 0.0
    %306 = vmatpush2.xpose.msra.mxu0 0.0
    %307 = vmatprep.subr.mxu0 0.0
    %308 = vmatpush2.xpose.msra.mxu0 0.0
    %309 = vmatprep.subr.mxu0 0.0
    %310 = vmatpush2.xpose.msra.mxu0 0.0
    %311 = vmatprep.subr.mxu0 0.0
    %312 = vmatpush2.xpose.msra.mxu0 0.0
    %313 = vmatprep.subr.mxu0 0.0
    %314 = vmatpush2.xpose.msra.mxu0 0.0
    %315 = vmatprep.subr.mxu0 0.0
    %316 = vmatpush2.xpose.msra.mxu0 0.0
    %317 = vmatprep.subr.mxu0 0.0
    %318 = vmatpush2.xpose.msra.mxu0 0.0
    %319 = vmatprep.subr.mxu0 0.0
    %320 = vmatpush2.xpose.msra.mxu0 0.0
    %321 = vmatprep.subr.mxu0 0.0
    %322 = vmatpush2.xpose.msra.mxu0 0.0
    %323 = vmatprep.subr.mxu0 0.0
    %324 = vmatpush2.xpose.msra.mxu0 0.0
    %325 = vmatprep.subr.mxu0 0.0
    %326 = vmatpush2.xpose.msra.mxu0 0.0
    %327 = vmatprep.mubr.f32.mxu0 0.0
    %v328 = vand.u32 %v32, 4294901760
    %v329 = vsub.f32 %v32, %v328
    %v330 = vand.u32 %v329, 4294901760
    %331 = vmatmul.mubr.f32.gmra.mxu0 %v330
    %v332 = vpop.f32.mrf.mxu0
    %v333 = vadd.f32 %v259, %v332
    %v334 = vpop.f32.mrf.mxu0
    %335 = vdwg.mxu0
    %336 = vmatprep.subr.mxu0 0.0
    %337 = vmatpush1.xpose.msra.mxu0 0.0
    %338 = vmatprep.subr.mxu0 0.0
    %339 = vmatpush1.xpose.msra.mxu0 0.0
    %340 = vmatprep.subr.mxu0 0.0
    %341 = vmatpush1.xpose.msra.mxu0 0.0
    %342 = vmatprep.subr.mxu0 0.0
    %343 = vmatpush1.xpose.msra.mxu0 0.0
    %344 = vmatprep.subr.mxu0 0.0
    %345 = vmatpush1.xpose.msra.mxu0 0.0
    %346 = vmatprep.subr.mxu0 0.0
    %347 = vmatpush1.xpose.msra.mxu0 0.0
    %348 = vmatprep.subr.mxu0 0.0
    %349 = vmatpush1.xpose.msra.mxu0 0.0
    %350 = vmatprep.subr.mxu0 0.0
    %351 = vmatpush1.xpose.msra.mxu0 0.0
    %352 = vmatprep.subr.mxu0 0.0
    %353 = vmatpush1.xpose.msra.mxu0 0.0
    %354 = vmatprep.subr.mxu0 0.0
    %355 = vmatpush1.xpose.msra.mxu0 0.0
    %356 = vmatprep.subr.mxu0 0.0
    %357 = vmatpush1.xpose.msra.mxu0 0.0
    %358 = vmatprep.subr.mxu0 0.0
    %359 = vmatpush1.xpose.msra.mxu0 0.0
    %360 = vmatprep.subr.mxu0 0.0
    %361 = vmatpush1.xpose.msra.mxu0 0.0
    %362 = vmatprep.subr.mxu0 0.0
    %363 = vmatpush1.xpose.msra.mxu0 0.0
    %364 = vmatprep.subr.mxu0 0.0
    %365 = vmatpush1.xpose.msra.mxu0 0.0
    %366 = vmatprep.subr.mxu0 0.0
    %v367 = vand.u32 %v34, 4294901760
    %v368 = vsub.f32 %v34, %v367
    %v369 = vand.u32 %v368, 4294901760
    %370 = vmatpush1.xpose.msra.mxu0 %v369
    %371 = vmatprep.subr.mxu0 0.0
    %372 = vmatpush2.xpose.msra.mxu0 0.0
    %373 = vmatprep.subr.mxu0 0.0
    %374 = vmatpush2.xpose.msra.mxu0 0.0
    %375 = vmatprep.subr.mxu0 0.0
    %376 = vmatpush2.xpose.msra.mxu0 0.0
    %377 = vmatprep.subr.mxu0 0.0
    %378 = vmatpush2.xpose.msra.mxu0 0.0
    %379 = vmatprep.subr.mxu0 0.0
    %380 = vmatpush2.xpose.msra.mxu0 0.0
    %381 = vmatprep.subr.mxu0 0.0
    %382 = vmatpush2.xpose.msra.mxu0 0.0
    %383 = vmatprep.subr.mxu0 0.0
    %384 = vmatpush2.xpose.msra.mxu0 0.0
    %385 = vmatprep.subr.mxu0 0.0
    %386 = vmatpush2.xpose.msra.mxu0 0.0
    %387 = vmatprep.subr.mxu0 0.0
    %388 = vmatpush2.xpose.msra.mxu0 0.0
    %389 = vmatprep.subr.mxu0 0.0
    %390 = vmatpush2.xpose.msra.mxu0 0.0
    %391 = vmatprep.subr.mxu0 0.0
    %392 = vmatpush2.xpose.msra.mxu0 0.0
    %393 = vmatprep.subr.mxu0 0.0
    %394 = vmatpush2.xpose.msra.mxu0 0.0
    %395 = vmatprep.subr.mxu0 0.0
    %396 = vmatpush2.xpose.msra.mxu0 0.0
    %397 = vmatprep.subr.mxu0 0.0
    %398 = vmatpush2.xpose.msra.mxu0 0.0
    %399 = vmatprep.subr.mxu0 0.0
    %400 = vmatpush2.xpose.msra.mxu0 0.0
    %401 = vmatprep.subr.mxu0 0.0
    %402 = vmatpush2.xpose.msra.mxu0 0.0
    %403 = vmatprep.mubr.f32.mxu0 0.0
    %v404 = vand.u32 %v32, 4294901760
    %405 = vmatmul.mubr.f32.gmra.mxu0 %v404
    %v406 = vpop.f32.mrf.mxu0
    %v407 = vadd.f32 %v333, %v406
    %v408 = vpop.f32.mrf.mxu0
    %409 = vdwg.mxu0
    %410 = vmatprep.subr.mxu0 0.0
    %411 = vmatpush1.xpose.msra.mxu0 0.0
    %412 = vmatprep.subr.mxu0 0.0
    %413 = vmatpush1.xpose.msra.mxu0 0.0
    %414 = vmatprep.subr.mxu0 0.0
    %415 = vmatpush1.xpose.msra.mxu0 0.0
    %416 = vmatprep.subr.mxu0 0.0
    %417 = vmatpush1.xpose.msra.mxu0 0.0
    %418 = vmatprep.subr.mxu0 0.0
    %419 = vmatpush1.xpose.msra.mxu0 0.0
    %420 = vmatprep.subr.mxu0 0.0
    %421 = vmatpush1.xpose.msra.mxu0 0.0
    %422 = vmatprep.subr.mxu0 0.0
    %423 = vmatpush1.xpose.msra.mxu0 0.0
    %424 = vmatprep.subr.mxu0 0.0
    %425 = vmatpush1.xpose.msra.mxu0 0.0
    %426 = vmatprep.subr.mxu0 0.0
    %427 = vmatpush1.xpose.msra.mxu0 0.0
    %428 = vmatprep.subr.mxu0 0.0
    %429 = vmatpush1.xpose.msra.mxu0 0.0
    %430 = vmatprep.subr.mxu0 0.0
    %431 = vmatpush1.xpose.msra.mxu0 0.0
    %432 = vmatprep.subr.mxu0 0.0
    %433 = vmatpush1.xpose.msra.mxu0 0.0
    %434 = vmatprep.subr.mxu0 0.0
    %435 = vmatpush1.xpose.msra.mxu0 0.0
    %436 = vmatprep.subr.mxu0 0.0
    %437 = vmatpush1.xpose.msra.mxu0 0.0
    %438 = vmatprep.subr.mxu0 0.0
    %439 = vmatpush1.xpose.msra.mxu0 0.0
    %440 = vmatprep.subr.mxu0 0.0
    %v441 = vand.u32 %v34, 4294901760
    %442 = vmatpush1.xpose.msra.mxu0 %v441
    %443 = vmatprep.subr.mxu0 0.0
    %444 = vmatpush2.xpose.msra.mxu0 0.0
    %445 = vmatprep.subr.mxu0 0.0
    %446 = vmatpush2.xpose.msra.mxu0 0.0
    %447 = vmatprep.subr.mxu0 0.0
    %448 = vmatpush2.xpose.msra.mxu0 0.0
    %449 = vmatprep.subr.mxu0 0.0
    %450 = vmatpush2.xpose.msra.mxu0 0.0
    %451 = vmatprep.subr.mxu0 0.0
    %452 = vmatpush2.xpose.msra.mxu0 0.0
    %453 = vmatprep.subr.mxu0 0.0
    %454 = vmatpush2.xpose.msra.mxu0 0.0
    %455 = vmatprep.subr.mxu0 0.0
    %456 = vmatpush2.xpose.msra.mxu0 0.0
    %457 = vmatprep.subr.mxu0 0.0
    %458 = vmatpush2.xpose.msra.mxu0 0.0
    %459 = vmatprep.subr.mxu0 0.0
    %460 = vmatpush2.xpose.msra.mxu0 0.0
    %461 = vmatprep.subr.mxu0 0.0
    %462 = vmatpush2.xpose.msra.mxu0 0.0
    %463 = vmatprep.subr.mxu0 0.0
    %464 = vmatpush2.xpose.msra.mxu0 0.0
    %465 = vmatprep.subr.mxu0 0.0
    %466 = vmatpush2.xpose.msra.mxu0 0.0
    %467 = vmatprep.subr.mxu0 0.0
    %468 = vmatpush2.xpose.msra.mxu0 0.0
    %469 = vmatprep.subr.mxu0 0.0
    %470 = vmatpush2.xpose.msra.mxu0 0.0
    %471 = vmatprep.subr.mxu0 0.0
    %472 = vmatpush2.xpose.msra.mxu0 0.0
    %473 = vmatprep.subr.mxu0 0.0
    %474 = vmatpush2.xpose.msra.mxu0 0.0
    %475 = vmatprep.mubr.f32.mxu0 0.0
    %v476 = vand.u32 %v32, 4294901760
    %477 = vmatmul.mubr.f32.gmra.mxu0 %v476
    %v478 = vpop.f32.mrf.mxu0
    %v479 = vadd.f32 %v407, %v478
    %v480 = vpop.f32.mrf.mxu0
    %481 = vdwg.mxu0
    %v482 = vlaneseq
    %v483 = vshrl.u32 %v482, 7
    %v484 = vlaneseq
    %v485 = vand.u32 %v484, 127
    %vm486 = vcmp.eq.s32.totalorder %v485, %v483
    %v487 = vsel %vm486, -inf, %v479
    %vm488 = vcmask 64512
    %v489 = vsel %vm488, %v487, -inf
    %490 = vmax.xlane.f32.xlu0 %v489
    %v491 = vpop.xlane.xlu0 %490
    %v492 = vsub.f32 %v487, %v491
    %v493 = vmul.f32 %v492, 1.442695
    %v494 = vpow.pop %v493
    %v495 = vsel %vm488, %v494, 0.0
    %496 = vadd.xlane.f32.xlu0 %v495
    %v497 = vpop.xlane.xlu0 %496
    %v498 = vlog2.pop %v497
    %v499 = vmul.f32 %v498, 0.6931472
    %v500 = vadd.f32 %v491, %v499
    %v501 = vmul.f32 %v29, %v28
    %v502 = vsel %vm30, %v501, 0.0
    %503 = vadd.xlane.f32.xlu0 %v502
    %v504 = vpop.xlane.xlu0 %503
    %v505 = vsub.f32 %v500, %v504
    %vm506 = vcmask 7168
    %507 = vst.msk [vmem:[%s2] sm:$0xff] %vm506, %v505
    %v508 = vsel %vm488, %v479, -inf
    %510 = vrot.lane.b32.xlu0 %v508, 127
    %v511 = vpop.permute.xlu0 %510
    %513 = vrot.lane.b32.xlu0 %v508, 126
    %v514 = vpop.permute.xlu0 %513
    %vm516 = vcmp.ge.s32.totalorder %v483, 4
    %v517 = vsel %vm516, 4, 0
    %v518 = vsub.s32 %v483, %v517
    %vm519 = vcmp.lt.s32.totalorder %v485, %v518
    %v520 = vadd.s32 %v518, 3
    %vm521 = vcmp.lt.s32.totalorder %v485, %v520
    %v522 = vsel %vm521, %v511, %v514
    %v523 = vsel %vm519, %v508, %v522
    %vm524 = vcmp.eq.s32.totalorder %v485, 6
    %vm525 = vcmp.lt.s32.totalorder %v485, 6
    %v526 = vsel %vm525, 1, 0
    %vm527 = vcmp.eq.s32.totalorder %v526, 1
    %v528 = vsel %vm527, %v523, -inf
    %v529 = vsel %vm524, 1, 0
    %vm530 = vcmp.eq.s32.totalorder %v529, 1
    %v531 = vsel %vm530, %v504, %v528
    %532 = vst [vmem:[#allocation5] sm:$0xff] %v531
    // Predicated region
    $region10: #{tpu_custom_call.1} parent=1 // pred_check
      _
    $region11: #{tpu_custom_call.1} parent=1 // pred_check_branch
      %534 = sbr.rel (0) target = $region13
    $region12: #{tpu_custom_call.1} parent=1 // pred_region
      %s536 = ssub.s32 128, 128
      %537 = vsyncadd [#allocation4], %s536
      %s539 = sshll.u32 [#allocation5], 4
      %s540 = int_to_ptr.vmem [resolvable:$true] %s539
      %542 = dma.vmem_to_hbm [thread:$0]  %s540, 128, %s1, [#allocation4]
    $region13: #{tpu_custom_call.1} parent=1 // pred_fallthru
      _
    // Predicated region
    $region14: #{tpu_custom_call.1} parent=1 // pred_check
      _
    $region15: #{tpu_custom_call.1} parent=1 // pred_check_branch
      %544 = sbr.rel (0) target = $region17
    $region16: #{tpu_custom_call.1} parent=1 // pred_region
      _
    $region17: #{tpu_custom_call.1} parent=1 // pred_fallthru
      _
    // Predicated region
    $region18: #{tpu_custom_call.1} parent=1 // pred_check
      _
    $region19: #{tpu_custom_call.1} parent=1 // pred_check_branch
      %546 = sbr.rel (0) target = $region21
    $region20: #{tpu_custom_call.1} parent=1 // pred_region
      %547 = dma.done [#allocation4], 128
    $region21: #{tpu_custom_call.1} parent=1 // pred_fallthru
      _
    // Predicated region
    $region22: #{tpu_custom_call.1} parent=1 // pred_check
      _
    $region23: #{tpu_custom_call.1} parent=1 // pred_check_branch
      %549 = sbr.rel (0) target = $region25
    $region24: #{tpu_custom_call.1} parent=1 // pred_region
      _
    $region25: #{tpu_custom_call.1} parent=1 // pred_fallthru
      _
    %550 = vsyncpa [#allocation3], 1
    %551 = vsyncpa [#allocation4], 1

</llo_original>
